<compile_context>
chip_gen: v5e
topology: v5e:2x2
jax: 0.10.0
libtpu: 0.0.40
codegen_flags: <defaults>
</compile_context>

<pallas_src>
import functools

import jax
import jax.numpy as jnp
from jax.experimental import pallas as pl
from jax.experimental.pallas import tpu as pltpu

EPSILON = float(jnp.finfo(jnp.float32).eps)


def _round_up(v, m):
    return ((v + m - 1) // m) * m


def _pick_unroll(n_layers, max_unroll):
    """Largest divisor of n_layers that is <= max_unroll."""
    u = 1
    for cand in range(1, min(n_layers, max_unroll) + 1):
        if n_layers % cand == 0:
            u = cand
    return u


def _kernel_factory(l_1, l_2, unroll):
    def kernel(h0_ref, x_ref, w1t_ref, w2t_ref, h_ref):
        # Seed the carried state with the initial h on the first grid step.
        @pl.when(pl.program_id(0) == 0)
        def _():
            h_ref[...] = h0_ref[...]

        cdt = w1t_ref.dtype                      # matmul operand dtype (f32 or bf16)
        x_c = x_ref[...].astype(cdt)             # constant across the unrolled layers
        h = h_ref[...]                           # carried state, always f32

        for u in range(unroll):
            w1t = w1t_ref[u]                     # (comp_p, comp_p)     == W1^T (padded)
            w2t = w2t_ref[u]                     # (features_p, comp_p) == W2^T (padded)

            # fc1(h) = h @ W1^T ; fc2(x) = x @ W2^T  (MXU-native A @ B, no transpose)
            fc1_h = jnp.dot(h.astype(cdt), w1t, preferred_element_type=jnp.float32)
            numerator = jnp.dot(x_c, w2t, preferred_element_type=jnp.float32)

            denominator = fc1_h + l_2 * h + l_1 + EPSILON
            h = numerator * pl.reciprocal(denominator, approx=False) * h

        h_ref[...] = h

    return kernel


@functools.partial(jax.jit, static_argnames=("l_1", "l_2", "weight_dtype", "max_unroll"))
def unsuper_layers_forward(h0, x, w1_all, w2_all, l_1=0.0, l_2=0.0,
                           weight_dtype=jnp.float32, max_unroll=8):
    """Run n_layers stacked UnsuperLayers inside one Pallas kernel.

    h0:     (batch, comp)
    x:      (batch, features)
    w1_all: (n_layers, comp, comp)      -- per-layer fc1.weight (PyTorch (out, in))
    w2_all: (n_layers, comp, features)  -- per-layer fc2.weight
    """
    n_layers, comp, comp2 = w1_all.shape
    assert comp == comp2
    batch, features = x.shape
    assert h0.shape == (batch, comp)
    assert w2_all.shape == (n_layers, comp, features)

    batch_p = _round_up(batch, 8)
    comp_p = _round_up(comp, 128)
    feat_p = _round_up(features, 128)

    # Pre-transpose once in HBM: store W^T so the kernel contracts A @ B directly.
    w1t = jnp.swapaxes(w1_all, 1, 2)             # (L, comp, comp)
    w2t = jnp.swapaxes(w2_all, 1, 2)             # (L, features, comp)

    # Zero-pad to lane/sublane-aligned shapes (exact for this update rule).
    h0_p = jnp.zeros((batch_p, comp_p), jnp.float32).at[:batch, :comp].set(
        h0.astype(jnp.float32))
    x_p = jnp.zeros((batch_p, feat_p), jnp.float32).at[:batch, :features].set(
        x.astype(jnp.float32))
    w1t_p = jnp.zeros((n_layers, comp_p, comp_p), weight_dtype).at[:, :comp, :comp].set(
        w1t.astype(weight_dtype))
    w2t_p = jnp.zeros((n_layers, feat_p, comp_p), weight_dtype).at[:, :features, :comp].set(
        w2t.astype(weight_dtype))

    unroll = _pick_unroll(n_layers, max_unroll)
    grid = (n_layers // unroll,)

    # Explicit VMEM budget: resident activations + double-buffered weight blocks.
    wbytes = jnp.dtype(weight_dtype).itemsize
    est = (4 * (2 * batch_p * comp_p + batch_p * feat_p)
           + 2 * unroll * wbytes * (comp_p * comp_p + feat_p * comp_p))
    vmem_limit = int(min(max(2 * est, 32 << 20), 64 << 20))

    kernel = _kernel_factory(float(l_1), float(l_2), unroll)

    out_p = pl.pallas_call(
        kernel,
        out_shape=jax.ShapeDtypeStruct((batch_p, comp_p), jnp.float32),
        grid_spec=pltpu.PrefetchScalarGridSpec(
            num_scalar_prefetch=0,
            grid=grid,
            in_specs=[
                # initial h: full block, constant across the layer axis
                pl.BlockSpec((batch_p, comp_p), lambda i: (0, 0)),
                # x: full block, constant across the layer axis
                pl.BlockSpec((batch_p, feat_p), lambda i: (0, 0)),
                # `unroll` layers of fc1 weights (transposed) per grid step
                pl.BlockSpec((unroll, comp_p, comp_p), lambda i: (i, 0, 0)),
                # `unroll` layers of fc2 weights (transposed) per grid step
                pl.BlockSpec((unroll, feat_p, comp_p), lambda i: (i, 0, 0)),
            ],
            # same output block every step -> resident accumulator (carried h)
            out_specs=pl.BlockSpec((batch_p, comp_p), lambda i: (0, 0)),
        ),
        compiler_params=pltpu.CompilerParams(
            dimension_semantics=("arbitrary",),
            vmem_limit_bytes=vmem_limit,
        ),
    )(h0_p, x_p, w1t_p, w2t_p)

    return out_p[:batch, :comp]


def unsuper_layer_forward(y, x, w1, w2, l_1=0.0, l_2=0.0):
    """Exactly the PyTorch UnsuperLayer.forward(y, x) (single layer)."""
    return unsuper_layers_forward(y, x, w1[None], w2[None], l_1=l_1, l_2=l_2)


def reference_forward(h, x, w1_all, w2_all, l_1=0.0, l_2=0.0):
    """Plain-JAX reference matching the PyTorch module semantics."""
    for w1, w2 in zip(w1_all, w2_all):
        denominator = h @ w1.T + l_2 * h + l_1 + EPSILON
        numerator = x @ w2.T
        h = (numerator / denominator) * h
    return h


if __name__ == "__main__":
    # Small shapes consistent with the module: batch samples, comp components,
    # features sites, n_layers stacked (unfolded) multiplicative-update layers.
    batch, comp, features, n_layers = 2, 4, 16, 3
    l_1 = 0.1
    l_2 = 0.2

    key = jax.random.PRNGKey(0)
    k_h, k_x, k_w1, k_w2 = jax.random.split(key, 4)

    # Nonnegative data/weights (NMF convention) keep the multiplicative update
    # well-conditioned; initialization is deterministic in-script.
    h0 = jax.random.uniform(k_h, (batch, comp), dtype=jnp.float32)
    x = jax.random.uniform(k_x, (batch, features), dtype=jnp.float32)
    w1_all = jax.random.uniform(k_w1, (n_layers, comp, comp), dtype=jnp.float32)
    w2_all = jax.random.uniform(k_w2, (n_layers, comp, features), dtype=jnp.float32)

    # Single layer: exactly UnsuperLayer.forward(y, x).
    out1 = jax.block_until_ready(
        unsuper_layer_forward(h0, x, w1_all[0], w2_all[0], l_1, l_2))
    ref1 = reference_forward(h0, x, w1_all[:1], w2_all[:1], l_1, l_2)
    assert out1.shape == (batch, comp)
    assert jnp.allclose(out1, ref1, rtol=1e-5, atol=1e-5), (out1, ref1)

    # Stacked layers (generalization), all inside one pallas_call.
    out = jax.block_until_ready(
        unsuper_layers_forward(h0, x, w1_all, w2_all, l_1, l_2))
    ref = reference_forward(h0, x, w1_all, w2_all, l_1, l_2)
    assert out.shape == (batch, comp)
    assert jnp.allclose(out, ref, rtol=1e-5, atol=1e-5), (out, ref)

    print("KERNEL_OK")
</pallas_src>

<mosaic_0001>
module attributes {stable_mosaic.version = 11 : i64} {
  func.func @kernel(%arg0: i32, %arg1: memref<8x128xf32, #tpu.memory_space<vmem>>, %arg2: memref<8x128xf32, #tpu.memory_space<vmem>>, %arg3: memref<1x128x128xf32, #tpu.memory_space<vmem>>, %arg4: memref<1x128x128xf32, #tpu.memory_space<vmem>>, %arg5: memref<8x128xf32, #tpu.memory_space<vmem>>) attributes {dimension_semantics = [#tpu.dimension_semantics<arbitrary>], iteration_bounds = array<i64: 1>, scalar_prefetch = 0 : i64, scratch_operands = 0 : i64, tpu.core_type = #tpu.core_type<tc>, window_params = [{pipeline_mode = #tpu.pipeline_mode<synchronous>, transform_indices = @transform_0, window_bounds = array<i64: 8, 128>}, {pipeline_mode = #tpu.pipeline_mode<synchronous>, transform_indices = @transform_1, window_bounds = array<i64: 8, 128>}, {transform_indices = @transform_2, window_bounds = array<i64: 1, 128, 128>}, {transform_indices = @transform_3, window_bounds = array<i64: 1, 128, 128>}, {pipeline_mode = #tpu.pipeline_mode<synchronous>, transform_indices = @transform_4, window_bounds = array<i64: 8, 128>}]} {
    %c0_i32 = arith.constant 0 : i32
    %0 = arith.cmpi eq, %arg0, %c0_i32 : i32
    %1 = arith.extui %0 : i1 to i32
    %c0_i32_0 = arith.constant 0 : i32
    %2 = arith.cmpi ne, %1, %c0_i32_0 : i32
    scf.if %2 {
      %c0_16 = arith.constant 0 : index
      %c0_17 = arith.constant 0 : index
      %22 = vector.load %arg1[%c0_16, %c0_17] : memref<8x128xf32, #tpu.memory_space<vmem>>, vector<8x128xf32>
      %c0_18 = arith.constant 0 : index
      %c0_19 = arith.constant 0 : index
      %23 = vector.load %arg5[%c0_18, %c0_19] : memref<8x128xf32, #tpu.memory_space<vmem>>, vector<8x128xf32>
      tpu.vector_store %arg5[%c0_18, %c0_19], %22 {strides = array<i32>} : memref<8x128xf32, #tpu.memory_space<vmem>>, vector<8x128xf32>,
    } else {
    }
    %c0 = arith.constant 0 : index
    %c0_1 = arith.constant 0 : index
    %3 = vector.load %arg2[%c0, %c0_1] : memref<8x128xf32, #tpu.memory_space<vmem>>, vector<8x128xf32>
    %c0_2 = arith.constant 0 : index
    %c0_3 = arith.constant 0 : index
    %4 = vector.load %arg5[%c0_2, %c0_3] : memref<8x128xf32, #tpu.memory_space<vmem>>, vector<8x128xf32>
    %c0_4 = arith.constant 0 : index
    %c0_5 = arith.constant 0 : index
    %c0_6 = arith.constant 0 : index
    %5 = vector.load %arg3[%c0_4, %c0_5, %c0_6] : memref<1x128x128xf32, #tpu.memory_space<vmem>>, vector<1x128x128xf32>
    %6 = vector.shape_cast %5 : vector<1x128x128xf32> to vector<128x128xf32>
    %c0_7 = arith.constant 0 : index
    %c0_8 = arith.constant 0 : index
    %c0_9 = arith.constant 0 : index
    %7 = vector.load %arg4[%c0_7, %c0_8, %c0_9] : memref<1x128x128xf32, #tpu.memory_space<vmem>>, vector<1x128x128xf32>
    %8 = vector.shape_cast %7 : vector<1x128x128xf32> to vector<128x128xf32>
    %cst = arith.constant dense<0.000000e+00> : vector<8x128xf32>
    %9 = tpu.matmul %4, %6, %cst {dimension_numbers = #tpu.dot_dimension_numbers<[1], [0], [0], [1], [0, 0, 1, 1], [], []>} : vector<8x128xf32>, vector<128x128xf32>, vector<8x128xf32> -> vector<8x128xf32>
    %cst_10 = arith.constant dense<0.000000e+00> : vector<8x128xf32>
    %10 = tpu.matmul %3, %8, %cst_10 {dimension_numbers = #tpu.dot_dimension_numbers<[1], [0], [0], [1], [0, 0, 1, 1], [], []>} : vector<8x128xf32>, vector<128x128xf32>, vector<8x128xf32> -> vector<8x128xf32>
    %cst_11 = arith.constant 2.000000e-01 : f32
    %11 = vector.broadcast %cst_11 : f32 to vector<8x128xf32>
    %12 = arith.mulf %11, %4 : vector<8x128xf32>
    %13 = arith.addf %9, %12 : vector<8x128xf32>
    %cst_12 = arith.constant 1.000000e-01 : f32
    %14 = vector.broadcast %cst_12 : f32 to vector<8x128xf32>
    %15 = arith.addf %13, %14 : vector<8x128xf32>
    %cst_13 = arith.constant 1.1920929E-7 : f32
    %16 = vector.broadcast %cst_13 : f32 to vector<8x128xf32>
    %17 = arith.addf %15, %16 : vector<8x128xf32>
    %18 = tpu.reciprocal %17 : vector<8x128xf32> -> vector<8x128xf32>
    %19 = arith.mulf %10, %18 : vector<8x128xf32>
    %20 = arith.mulf %19, %4 : vector<8x128xf32>
    %c0_14 = arith.constant 0 : index
    %c0_15 = arith.constant 0 : index
    %21 = vector.load %arg5[%c0_14, %c0_15] : memref<8x128xf32, #tpu.memory_space<vmem>>, vector<8x128xf32>
    tpu.vector_store %arg5[%c0_14, %c0_15], %20 {strides = array<i32>} : memref<8x128xf32, #tpu.memory_space<vmem>>, vector<8x128xf32>,
    return
  }
  func.func @transform_0(%arg0: i32) -> (i32, i32) {
    %c0_i32 = arith.constant 0 : i32
    %c0_i32_0 = arith.constant 0 : i32
    %c0_i32_1 = arith.constant 0 : i32
    return %c0_i32, %c0_i32_0 : i32, i32
  }
  func.func @transform_1(%arg0: i32) -> (i32, i32) {
    %c0_i32 = arith.constant 0 : i32
    %c0_i32_0 = arith.constant 0 : i32
    %c0_i32_1 = arith.constant 0 : i32
    return %c0_i32, %c0_i32_0 : i32, i32
  }
  func.func @transform_2(%arg0: i32) -> (i32, i32, i32) {
    %c0_i32 = arith.constant 0 : i32
    %c0_i32_0 = arith.constant 0 : i32
    %c0_i32_1 = arith.constant 0 : i32
    return %arg0, %c0_i32, %c0_i32_0 : i32, i32, i32
  }
  func.func @transform_3(%arg0: i32) -> (i32, i32, i32) {
    %c0_i32 = arith.constant 0 : i32
    %c0_i32_0 = arith.constant 0 : i32
    %c0_i32_1 = arith.constant 0 : i32
    return %arg0, %c0_i32, %c0_i32_0 : i32, i32, i32
  }
  func.func @transform_4(%arg0: i32) -> (i32, i32) {
    %c0_i32 = arith.constant 0 : i32
    %c0_i32_0 = arith.constant 0 : i32
    %c0_i32_1 = arith.constant 0 : i32
    return %c0_i32, %c0_i32_0 : i32, i32
  }
}

</mosaic_0001>

<llo_original>
// kernel: unsuper_layers_forward.1
$region0: #{unsuper_layers_forward.1}
  #allocation0 [shape = 'u32[]', space=smem, size = 0x4, offset = 0x4, fixed_abs, tag = 'smem constant byte address 0x4 - core index']
  #allocation1 [shape = 'u32[72,128]{1,0:T(1,128)}', space=vmem, size = 0x9000, scoped, tag = 'internal scratch']
  %s0 = inlined_call_operand.vmem [shape: f32[8,128], index: 0, kind: input, shape index: {}]
  %s1 = inlined_call_operand.vmem [shape: f32[8,128], index: 1, kind: input, shape index: {}]
  %s2 = inlined_call_operand.vmem [shape: f32[1,128,128], index: 2, kind: input, shape index: {}]
  %s3 = inlined_call_operand.vmem [shape: f32[1,128,128], index: 3, kind: input, shape index: {}]
  %s4 = inlined_call_operand.vmem [shape: f32[8,128], index: 4, kind: output, shape index: {}]
  %s5 = sld [smem:[#allocation0]]
  $region30: #{unsuper_layers_forward.1} parent=0
    _
  %s7 = ssub.s32 1, %s5
  %s8 = scalar_select 0, %s7, %s5
  // Predicated region
  $region2: #{unsuper_layers_forward.1} parent=0 // pred_check
    _
  $region3: #{unsuper_layers_forward.1} parent=0 // pred_check_branch
    %10 = sbr.rel (0) target = $region5
  $region4: #{unsuper_layers_forward.1} parent=0 // pred_region
    _
  $region5: #{unsuper_layers_forward.1} parent=0 // pred_fallthru
    _
  // Predicated region
  $region6: #{unsuper_layers_forward.1} parent=0 // pred_check
    _
  $region7: #{unsuper_layers_forward.1} parent=0 // pred_check_branch
    %12 = sbr.rel (0) target = $region9
  $region8: #{unsuper_layers_forward.1} parent=0 // pred_region
    _
  $region9: #{unsuper_layers_forward.1} parent=0 // pred_fallthru
    _
  // Predicated region
  $region10: #{unsuper_layers_forward.1} parent=0 // pred_check
    _
  $region11: #{unsuper_layers_forward.1} parent=0 // pred_check_branch
    %14 = sbr.rel (0) target = $region13
  $region12: #{unsuper_layers_forward.1} parent=0 // pred_region
    _
  $region13: #{unsuper_layers_forward.1} parent=0 // pred_fallthru
    _
  // Predicated region
  $region14: #{unsuper_layers_forward.1} parent=0 // pred_check
    _
  $region15: #{unsuper_layers_forward.1} parent=0 // pred_check_branch
    %16 = sbr.rel (0) target = $region17
  $region16: #{unsuper_layers_forward.1} parent=0 // pred_region
    _
  $region17: #{unsuper_layers_forward.1} parent=0 // pred_fallthru
    _
  %p17 = scmp.eq.s32.totalorder 0, 0
  // Predicated region
  $region18: #{unsuper_layers_forward.1} parent=0 // pred_check
    %p18 = pneg %p17
  $region19: #{unsuper_layers_forward.1} parent=0 // pred_check_branch
    %20 = sbr.rel (%p18) target = $region21
  $region20: #{unsuper_layers_forward.1} parent=0 // pred_region
    %v21 = vld [vmem:[%s0] sm:$0xff]
    %22 = vst [vmem:[%s4] sm:$0xff] %v21
  $region21: #{unsuper_layers_forward.1} parent=0 // pred_fallthru
    _
  %v23 = vld [vmem:[%s1] sm:$0xff]
  %v24 = vld [vmem:[%s4] sm:$0xff]
  %v25 = vld [vmem:[%s2] sm:$0xff]
  %v26 = vld [vmem:[%s2 + $0x8] sm:$0xff]
  %v27 = vld [vmem:[%s2 + $0x10] sm:$0xff]
  %v28 = vld [vmem:[%s2 + $0x18] sm:$0xff]
  %v29 = vld [vmem:[%s2 + $0x20] sm:$0xff]
  %v30 = vld [vmem:[%s2 + $0x28] sm:$0xff]
  %v31 = vld [vmem:[%s2 + $0x30] sm:$0xff]
  %v32 = vld [vmem:[%s2 + $0x38] sm:$0xff]
  %v33 = vld [vmem:[%s2 + $0x40] sm:$0xff]
  %v34 = vld [vmem:[%s2 + $0x48] sm:$0xff]
  %v35 = vld [vmem:[%s2 + $0x50] sm:$0xff]
  %v36 = vld [vmem:[%s2 + $0x58] sm:$0xff]
  %v37 = vld [vmem:[%s2 + $0x60] sm:$0xff]
  %v38 = vld [vmem:[%s2 + $0x68] sm:$0xff]
  %v39 = vld [vmem:[%s2 + $0x70] sm:$0xff]
  %v40 = vld [vmem:[%s2 + $0x78] sm:$0xff]
  %v41 = vld [vmem:[%s3] sm:$0xff]
  %v42 = vld [vmem:[%s3 + $0x8] sm:$0xff]
  %v43 = vld [vmem:[%s3 + $0x10] sm:$0xff]
  %v44 = vld [vmem:[%s3 + $0x18] sm:$0xff]
  %v45 = vld [vmem:[%s3 + $0x20] sm:$0xff]
  %v46 = vld [vmem:[%s3 + $0x28] sm:$0xff]
  %v47 = vld [vmem:[%s3 + $0x30] sm:$0xff]
  %v48 = vld [vmem:[%s3 + $0x38] sm:$0xff]
  %v49 = vld [vmem:[%s3 + $0x40] sm:$0xff]
  %v50 = vld [vmem:[%s3 + $0x48] sm:$0xff]
  %v51 = vld [vmem:[%s3 + $0x50] sm:$0xff]
  %v52 = vld [vmem:[%s3 + $0x58] sm:$0xff]
  %v53 = vld [vmem:[%s3 + $0x60] sm:$0xff]
  %v54 = vld [vmem:[%s3 + $0x68] sm:$0xff]
  %v55 = vld [vmem:[%s3 + $0x70] sm:$0xff]
  %v56 = vld [vmem:[%s3 + $0x78] sm:$0xff]
  %57 = vmatpush.msra.mxu0 %v56
  %58 = vmatpush.msra.mxu0 %v55
  %59 = vmatpush.msra.mxu0 %v54
  %60 = vmatpush.msra.mxu0 %v53
  %61 = vmatpush.msra.mxu0 %v52
  %62 = vmatpush.msra.mxu0 %v51
  %63 = vmatpush.msra.mxu0 %v50
  %64 = vmatpush.msra.mxu0 %v49
  %65 = vmatpush.msra.mxu0 %v48
  %66 = vmatpush.msra.mxu0 %v47
  %67 = vmatpush.msra.mxu0 %v46
  %68 = vmatpush.msra.mxu0 %v45
  %69 = vmatpush.msra.mxu0 %v44
  %70 = vmatpush.msra.mxu0 %v43
  %71 = vmatpush.msra.mxu0 %v42
  %72 = vmatpush.msra.mxu0 %v41
  %73 = vmatmul.f32.gmra.mxu0 %v23
  %v74 = vpop.f32.mrf.mxu0
  %v75 = vadd.f32 0.0, %v74
  %76 = vdwg.mxu0
  %v77 = vmul.f32 %v24, 0.2
  %78 = vmatpush.msra.mxu0 %v40
  %79 = vmatpush.msra.mxu0 %v39
  %80 = vmatpush.msra.mxu0 %v38
  %81 = vmatpush.msra.mxu0 %v37
  %82 = vmatpush.msra.mxu0 %v36
  %83 = vmatpush.msra.mxu0 %v35
  %84 = vmatpush.msra.mxu0 %v34
  %85 = vmatpush.msra.mxu0 %v33
  %86 = vmatpush.msra.mxu0 %v32
  %87 = vmatpush.msra.mxu0 %v31
  %88 = vmatpush.msra.mxu0 %v30
  %89 = vmatpush.msra.mxu0 %v29
  %90 = vmatpush.msra.mxu0 %v28
  %91 = vmatpush.msra.mxu0 %v27
  %92 = vmatpush.msra.mxu0 %v26
  %93 = vmatpush.msra.mxu0 %v25
  %94 = vmatmul.f32.gmra.mxu0 %v24
  %v95 = vpop.f32.mrf.mxu0
  %v96 = vadd.f32 %v77, %v95
  %97 = vdwg.mxu0
  %v98 = vadd.f32 %v96, 0.1
  %v99 = vadd.f32 %v98, 1.1920929e-07
  %v100 = vrcp.pop %v99
  %v101 = vmul.f32 %v99, %v100
  %v102 = vsub.f32 1.0, %v101
  %v103 = vmul.f32 %v100, %v102
  %v104 = vadd.f32 %v100, %v103
  %vm105 = vweird.f32 %v99
  %vm106 = vweird.f32 %v100
  %vm107 = vmor %vm105, %vm106
  %v108 = vsel %vm107, %v100, %v104
  %v109 = vand.u32 2147483647, %v99
  %vm110 = vcmp.eq.f32.partialorder %v109, 8.507059e+37
  %v111 = vand.u32 %v99, 2147483648
  %v112 = vor.u32 1.1754944e-38, %v111
  %v113 = vsel %vm110, %v112, %v108
  %v114 = vmul.f32 %v75, %v113
  %v115 = vmul.f32 %v114, %v24
  %116 = vst [vmem:[%s4] sm:$0xff] %v115
  // Predicated region
  $region22: #{unsuper_layers_forward.1} parent=0 // pred_check
    _
  $region23: #{unsuper_layers_forward.1} parent=0 // pred_check_branch
    %118 = sbr.rel (0) target = $region25
  $region24: #{unsuper_layers_forward.1} parent=0 // pred_region
    _
  $region25: #{unsuper_layers_forward.1} parent=0 // pred_fallthru
    _
  // Predicated region
  $region26: #{unsuper_layers_forward.1} parent=0 // pred_check
    _
  $region27: #{unsuper_layers_forward.1} parent=0 // pred_check_branch
    %120 = sbr.rel (0) target = $region29
  $region28: #{unsuper_layers_forward.1} parent=0 // pred_region
    _
  $region29: #{unsuper_layers_forward.1} parent=0 // pred_fallthru
    _

</llo_original>
